<compile_context>
chip_gen: v7x
topology: tpu7x:2x2x1
jax: 0.10.0
libtpu: 0.0.40
codegen_flags: <defaults>
</compile_context>

<pallas_src>
import functools

import jax
import jax.numpy as jnp
import numpy as np
from jax import lax
from jax.experimental import pallas as pl
from jax.experimental.pallas import tpu as pltpu


def _plan_rows(w, s, d, h_pool):
    """Dedup the input rows used by the H-only conv; give each (pool-parity, tap) a contiguous run.

    For pooled row j, parity p (conv row 2j+p) and tap k the conv reads input row
        (2j + p) * s + k * d,  j in [0, h_pool)
    an arithmetic sequence of stride 2s.  Sequences sharing a residue mod 2s are shifted copies of
    the same lattice, so storing each lattice once makes every (p, k) sequence a contiguous run of
    rows in the packed array.  Returns (rows, start): `rows` are original H indices in packed order,
    start[(p, k)] is the first packed-row index of that (p, k) run.  All values are Python ints.
    """
    step = 2 * s
    groups = {}
    for p in range(2):
        for k in range(w):
            off = p * s + k * d
            groups.setdefault(off % step, []).append((p, k, off // step))
    rows, start, base = [], {}, 0
    for rho in sorted(groups):
        entries = groups[rho]
        t_min = min(t for _, _, t in entries)
        t_max = max(t for _, _, t in entries) + h_pool - 1
        rows.extend(rho + step * t for t in range(t_min, t_max + 1))
        for p, k, t in entries:
            start[(p, k)] = base + (t - t_min)
        base += t_max - t_min + 1
    return np.asarray(rows, dtype=np.int32), start


def _make_kernel(C, W_sp, w, h_pool, start_rows):
    """Fused conv(+bias) -> ReLU -> BN affine -> MaxPool(2,1) on one batch element."""
    M = h_pool * W_sp

    def kernel(xr_ref, w_ref, p_ref, o_ref):
        # xr_ref: (1, C, Hr*W)   packed input rows, lane dim = flattened (packed_row, W)
        # w_ref : (F, w*C)       w_ref[f, k*C + c] = weight[f, c, k]
        # p_ref : (F, 3)         columns = (bias, bn_scale, bn_shift)
        # o_ref : (1, F, h_pool*W)
        bias = p_ref[:, 0:1]
        scale = p_ref[:, 1:2]
        shift = p_ref[:, 2:3]

        def conv_rows(p):
            acc = None
            for k in range(w):  # static unroll over the w taps
                lo = start_rows[(p, k)] * W_sp
                rhs = xr_ref[0, :, lo:lo + M]                 # (C, h_pool*W), static slice
                lhs = w_ref[:, k * C:(k + 1) * C]             # (F, C)
                y = jnp.dot(lhs, rhs, preferred_element_type=jnp.float32)
                acc = y if acc is None else acc + y
            y = jnp.maximum(acc + bias, 0.0)                  # conv bias + ReLU
            return y * scale + shift                          # eval-mode BatchNorm affine

        # MaxPool2d((2, 1)): elementwise max of the two adjacent conv rows (after BN,
        # since the BN scale may be negative).
        o_ref[0] = jnp.maximum(conv_rows(0), conv_rows(1))

    return kernel


@functools.partial(jax.jit, static_argnames=("stride", "dilation"))
def nopad_conv_block(x, weight, bias, gamma, beta, running_mean, running_var,
                     *, stride, dilation, eps=1e-5):
    N, C, H, W_sp = x.shape
    F, _, w = weight.shape
    h_out = (H - dilation * (w - 1) - 1) // stride + 1
    h_pool = h_out // 2
    M = h_pool * W_sp

    # --- single packing pass over x: gather only the rows the conv touches (dedup'd) and flatten
    #     (packed_row, W) into a lane-dense minor dim.  For s=2, d=2, w=3 this is half of x. ---
    rows, start_rows = _plan_rows(w, stride, dilation, h_pool)
    Hr = int(rows.shape[0])
    xr = jnp.take(x, jnp.asarray(rows), axis=2).reshape(N, C, Hr * W_sp)

    # --- parameter folding (tiny) ---
    w_mat = jnp.transpose(weight, (0, 2, 1)).reshape(F, w * C)    # [f, k*C + c] = weight[f, c, k]
    scale = gamma * lax.rsqrt(running_var + eps)
    shift = beta - running_mean * scale
    params = jnp.stack([bias, scale, shift], axis=1)              # (F, 3)

    kernel = _make_kernel(C, W_sp, w, h_pool, start_rows)
    out = pl.pallas_call(
        kernel,
        out_shape=jax.ShapeDtypeStruct((N, F, M), jnp.float32),
        grid=(N,),
        in_specs=[
            pl.BlockSpec((1, C, Hr * W_sp), lambda n: (n, 0, 0)),
            pl.BlockSpec((F, w * C), lambda n: (0, 0)),
            pl.BlockSpec((F, 3), lambda n: (0, 0)),
        ],
        out_specs=pl.BlockSpec((1, F, M), lambda n: (n, 0, 0)),
        compiler_params=pltpu.CompilerParams(dimension_semantics=("parallel",)),
    )(xr, w_mat, params)

    # Output is already in NCHW order; this reshape is free.
    return out.reshape(N, F, h_pool, W_sp)


def _reference(x, weight, bias, gamma, beta, running_mean, running_var, *, stride, dilation, eps=1e-5):
    """Pure-JAX reference of the eval-mode forward pass."""
    F = weight.shape[0]
    y = lax.conv_general_dilated(
        x, weight[..., None], window_strides=(stride, 1), padding="VALID",
        rhs_dilation=(dilation, 1), dimension_numbers=("NCHW", "OIHW", "NCHW"))
    y = y + bias.reshape(1, F, 1, 1)
    y = jnp.maximum(y, 0.0)
    y = (y - running_mean.reshape(1, F, 1, 1)) / jnp.sqrt(running_var.reshape(1, F, 1, 1) + eps)
    y = y * gamma.reshape(1, F, 1, 1) + beta.reshape(1, F, 1, 1)
    hp = y.shape[2] // 2
    return jnp.maximum(y[:, :, 0:2 * hp:2, :], y[:, :, 1:2 * hp:2, :])


if __name__ == "__main__":
    # Module hyperparameters (synthetic, deterministic).
    f, w, s, d, in_channels = 8, 3, 2, 2, 4
    N, H, W_sp = 2, 16, 16

    key = jax.random.PRNGKey(0)
    kx, kw, kb, kg, kbe, km, kv = jax.random.split(key, 7)

    x = jax.random.normal(kx, (N, in_channels, H, W_sp), dtype=jnp.float32)
    weight = jax.random.normal(kw, (f, in_channels, w), dtype=jnp.float32) * 0.1   # torch (f, C, w, 1), width dim dropped
    bias = jax.random.normal(kb, (f,), dtype=jnp.float32) * 0.1
    gamma = jax.random.normal(kg, (f,), dtype=jnp.float32) * 0.5 + 1.0
    beta = jax.random.normal(kbe, (f,), dtype=jnp.float32) * 0.1
    running_mean = jax.random.normal(km, (f,), dtype=jnp.float32) * 0.1
    running_var = jnp.abs(jax.random.normal(kv, (f,), dtype=jnp.float32)) * 0.5 + 0.5

    out = nopad_conv_block(x, weight, bias, gamma, beta, running_mean, running_var,
                           stride=s, dilation=d)
    out = jax.block_until_ready(out)

    ref = _reference(x, weight, bias, gamma, beta, running_mean, running_var,
                     stride=s, dilation=d)
    np.testing.assert_allclose(np.asarray(out), np.asarray(ref), atol=1e-4, rtol=1e-4)

    print("KERNEL_OK")
</pallas_src>

<mosaic_0001>
module attributes {stable_mosaic.version = 11 : i64} {
  func.func @kernel(%arg0: i32, %arg1: memref<1x4x128xf32, #tpu.memory_space<vmem>>, %arg2: memref<8x12xf32, #tpu.memory_space<vmem>>, %arg3: memref<8x3xf32, #tpu.memory_space<vmem>>, %arg4: memref<1x8x48xf32, #tpu.memory_space<vmem>>) attributes {dimension_semantics = [#tpu.dimension_semantics<parallel>], iteration_bounds = array<i64: 2>, scalar_prefetch = 0 : i64, scratch_operands = 0 : i64, tpu.core_type = #tpu.core_type<tc>, window_params = [{transform_indices = @transform_0, window_bounds = array<i64: 1, 4, 128>}, {pipeline_mode = #tpu.pipeline_mode<synchronous>, transform_indices = @transform_1, window_bounds = array<i64: 8, 12>}, {pipeline_mode = #tpu.pipeline_mode<synchronous>, transform_indices = @transform_2, window_bounds = array<i64: 8, 3>}, {transform_indices = @transform_3, window_bounds = array<i64: 1, 8, 48>}]} {
    %c0 = arith.constant 0 : index
    %c0_0 = arith.constant 0 : index
    %0 = vector.load %arg3[%c0, %c0_0] : memref<8x3xf32, #tpu.memory_space<vmem>>, vector<8x1xf32>
    %c0_1 = arith.constant 0 : index
    %c1 = arith.constant 1 : index
    %1 = vector.load %arg3[%c0_1, %c1] : memref<8x3xf32, #tpu.memory_space<vmem>>, vector<8x1xf32>
    %c0_2 = arith.constant 0 : index
    %c2 = arith.constant 2 : index
    %2 = vector.load %arg3[%c0_2, %c2] : memref<8x3xf32, #tpu.memory_space<vmem>>, vector<8x1xf32>
    %c0_3 = arith.constant 0 : index
    %c0_4 = arith.constant 0 : index
    %c0_5 = arith.constant 0 : index
    %3 = vector.load %arg1[%c0_3, %c0_4, %c0_5] : memref<1x4x128xf32, #tpu.memory_space<vmem>>, vector<1x4x48xf32>
    %4 = vector.shape_cast %3 : vector<1x4x48xf32> to vector<4x48xf32>
    %c0_6 = arith.constant 0 : index
    %c0_7 = arith.constant 0 : index
    %5 = vector.load %arg2[%c0_6, %c0_7] : memref<8x12xf32, #tpu.memory_space<vmem>>, vector<8x4xf32>
    %cst = arith.constant dense<0.000000e+00> : vector<8x48xf32>
    %6 = tpu.matmul %5, %4, %cst {dimension_numbers = #tpu.dot_dimension_numbers<[1], [0], [0], [1], [0, 0, 1, 1], [], []>} : vector<8x4xf32>, vector<4x48xf32>, vector<8x48xf32> -> vector<8x48xf32>
    %c0_8 = arith.constant 0 : index
    %c0_9 = arith.constant 0 : index
    %c64 = arith.constant 64 : index
    %7 = vector.load %arg1[%c0_8, %c0_9, %c64] : memref<1x4x128xf32, #tpu.memory_space<vmem>>, vector<1x4x48xf32>
    %8 = vector.shape_cast %7 : vector<1x4x48xf32> to vector<4x48xf32>
    %c0_10 = arith.constant 0 : index
    %c4 = arith.constant 4 : index
    %9 = vector.load %arg2[%c0_10, %c4] : memref<8x12xf32, #tpu.memory_space<vmem>>, vector<8x4xf32>
    %cst_11 = arith.constant dense<0.000000e+00> : vector<8x48xf32>
    %10 = tpu.matmul %9, %8, %cst_11 {dimension_numbers = #tpu.dot_dimension_numbers<[1], [0], [0], [1], [0, 0, 1, 1], [], []>} : vector<8x4xf32>, vector<4x48xf32>, vector<8x48xf32> -> vector<8x48xf32>
    %11 = arith.addf %6, %10 : vector<8x48xf32>
    %c0_12 = arith.constant 0 : index
    %c0_13 = arith.constant 0 : index
    %c16 = arith.constant 16 : index
    %12 = vector.load %arg1[%c0_12, %c0_13, %c16] : memref<1x4x128xf32, #tpu.memory_space<vmem>>, vector<1x4x48xf32>
    %13 = vector.shape_cast %12 : vector<1x4x48xf32> to vector<4x48xf32>
    %c0_14 = arith.constant 0 : index
    %c8 = arith.constant 8 : index
    %14 = vector.load %arg2[%c0_14, %c8] : memref<8x12xf32, #tpu.memory_space<vmem>>, vector<8x4xf32>
    %cst_15 = arith.constant dense<0.000000e+00> : vector<8x48xf32>
    %15 = tpu.matmul %14, %13, %cst_15 {dimension_numbers = #tpu.dot_dimension_numbers<[1], [0], [0], [1], [0, 0, 1, 1], [], []>} : vector<8x4xf32>, vector<4x48xf32>, vector<8x48xf32> -> vector<8x48xf32>
    %16 = arith.addf %11, %15 : vector<8x48xf32>
    %17 = vector.broadcast %0 : vector<8x1xf32> to vector<8x48xf32>
    %18 = arith.addf %16, %17 : vector<8x48xf32>
    %cst_16 = arith.constant 0.000000e+00 : f32
    %19 = vector.broadcast %cst_16 : f32 to vector<8x48xf32>
    %20 = arith.maximumf %18, %19 : vector<8x48xf32>
    %21 = vector.broadcast %1 : vector<8x1xf32> to vector<8x48xf32>
    %22 = arith.mulf %20, %21 : vector<8x48xf32>
    %23 = vector.broadcast %2 : vector<8x1xf32> to vector<8x48xf32>
    %24 = arith.addf %22, %23 : vector<8x48xf32>
    %c0_17 = arith.constant 0 : index
    %c0_18 = arith.constant 0 : index
    %c64_19 = arith.constant 64 : index
    %25 = vector.load %arg1[%c0_17, %c0_18, %c64_19] : memref<1x4x128xf32, #tpu.memory_space<vmem>>, vector<1x4x48xf32>
    %26 = vector.shape_cast %25 : vector<1x4x48xf32> to vector<4x48xf32>
    %c0_20 = arith.constant 0 : index
    %c0_21 = arith.constant 0 : index
    %27 = vector.load %arg2[%c0_20, %c0_21] : memref<8x12xf32, #tpu.memory_space<vmem>>, vector<8x4xf32>
    %cst_22 = arith.constant dense<0.000000e+00> : vector<8x48xf32>
    %28 = tpu.matmul %27, %26, %cst_22 {dimension_numbers = #tpu.dot_dimension_numbers<[1], [0], [0], [1], [0, 0, 1, 1], [], []>} : vector<8x4xf32>, vector<4x48xf32>, vector<8x48xf32> -> vector<8x48xf32>
    %c0_23 = arith.constant 0 : index
    %c0_24 = arith.constant 0 : index
    %c16_25 = arith.constant 16 : index
    %29 = vector.load %arg1[%c0_23, %c0_24, %c16_25] : memref<1x4x128xf32, #tpu.memory_space<vmem>>, vector<1x4x48xf32>
    %30 = vector.shape_cast %29 : vector<1x4x48xf32> to vector<4x48xf32>
    %c0_26 = arith.constant 0 : index
    %c4_27 = arith.constant 4 : index
    %31 = vector.load %arg2[%c0_26, %c4_27] : memref<8x12xf32, #tpu.memory_space<vmem>>, vector<8x4xf32>
    %cst_28 = arith.constant dense<0.000000e+00> : vector<8x48xf32>
    %32 = tpu.matmul %31, %30, %cst_28 {dimension_numbers = #tpu.dot_dimension_numbers<[1], [0], [0], [1], [0, 0, 1, 1], [], []>} : vector<8x4xf32>, vector<4x48xf32>, vector<8x48xf32> -> vector<8x48xf32>
    %33 = arith.addf %28, %32 : vector<8x48xf32>
    %c0_29 = arith.constant 0 : index
    %c0_30 = arith.constant 0 : index
    %c80 = arith.constant 80 : index
    %34 = vector.load %arg1[%c0_29, %c0_30, %c80] : memref<1x4x128xf32, #tpu.memory_space<vmem>>, vector<1x4x48xf32>
    %35 = vector.shape_cast %34 : vector<1x4x48xf32> to vector<4x48xf32>
    %c0_31 = arith.constant 0 : index
    %c8_32 = arith.constant 8 : index
    %36 = vector.load %arg2[%c0_31, %c8_32] : memref<8x12xf32, #tpu.memory_space<vmem>>, vector<8x4xf32>
    %cst_33 = arith.constant dense<0.000000e+00> : vector<8x48xf32>
    %37 = tpu.matmul %36, %35, %cst_33 {dimension_numbers = #tpu.dot_dimension_numbers<[1], [0], [0], [1], [0, 0, 1, 1], [], []>} : vector<8x4xf32>, vector<4x48xf32>, vector<8x48xf32> -> vector<8x48xf32>
    %38 = arith.addf %33, %37 : vector<8x48xf32>
    %39 = vector.broadcast %0 : vector<8x1xf32> to vector<8x48xf32>
    %40 = arith.addf %38, %39 : vector<8x48xf32>
    %cst_34 = arith.constant 0.000000e+00 : f32
    %41 = vector.broadcast %cst_34 : f32 to vector<8x48xf32>
    %42 = arith.maximumf %40, %41 : vector<8x48xf32>
    %43 = vector.broadcast %1 : vector<8x1xf32> to vector<8x48xf32>
    %44 = arith.mulf %42, %43 : vector<8x48xf32>
    %45 = vector.broadcast %2 : vector<8x1xf32> to vector<8x48xf32>
    %46 = arith.addf %44, %45 : vector<8x48xf32>
    %47 = arith.maximumf %24, %46 : vector<8x48xf32>
    %c0_35 = arith.constant 0 : index
    %c0_36 = arith.constant 0 : index
    %c0_37 = arith.constant 0 : index
    %48 = vector.load %arg4[%c0_35, %c0_36, %c0_37] : memref<1x8x48xf32, #tpu.memory_space<vmem>>, vector<1x8x48xf32>
    %49 = vector.shape_cast %48 : vector<1x8x48xf32> to vector<8x48xf32>
    %50 = vector.shape_cast %47 : vector<8x48xf32> to vector<1x8x48xf32>
    tpu.vector_store %arg4[%c0_35, %c0_36, %c0_37], %50 {strides = array<i32>} : memref<1x8x48xf32, #tpu.memory_space<vmem>>, vector<1x8x48xf32>,
    return
  }
  func.func @transform_0(%arg0: i32) -> (i32, i32, i32) {
    %c0_i32 = arith.constant 0 : i32
    %c0_i32_0 = arith.constant 0 : i32
    %c0_i32_1 = arith.constant 0 : i32
    return %arg0, %c0_i32, %c0_i32_0 : i32, i32, i32
  }
  func.func @transform_1(%arg0: i32) -> (i32, i32) {
    %c0_i32 = arith.constant 0 : i32
    %c0_i32_0 = arith.constant 0 : i32
    %c0_i32_1 = arith.constant 0 : i32
    return %c0_i32, %c0_i32_0 : i32, i32
  }
  func.func @transform_2(%arg0: i32) -> (i32, i32) {
    %c0_i32 = arith.constant 0 : i32
    %c0_i32_0 = arith.constant 0 : i32
    %c0_i32_1 = arith.constant 0 : i32
    return %c0_i32, %c0_i32_0 : i32, i32
  }
  func.func @transform_3(%arg0: i32) -> (i32, i32, i32) {
    %c0_i32 = arith.constant 0 : i32
    %c0_i32_0 = arith.constant 0 : i32
    %c0_i32_1 = arith.constant 0 : i32
    return %arg0, %c0_i32, %c0_i32_0 : i32, i32, i32
  }
}

</mosaic_0001>

<llo_original>
// kernel: nopad_conv_block.1
$region0: #{nopad_conv_block.1}
  #allocation0 [shape = 'u32[]', space=smem, size = 0x4, offset = 0x4, fixed_abs, tag = 'smem constant byte address 0x4 - core index']
  #allocation1 [shape = 'u32[144,128]{1,0:T(1,128)}', space=vmem, size = 0x12000, scoped, tag = 'internal scratch']
  %s0 = inlined_call_operand.vmem [shape: f32[2,4,128], index: 0, kind: input, shape index: {}]
  %s1 = inlined_call_operand.vmem [shape: f32[8,12], index: 1, kind: input, shape index: {}]
  %s2 = inlined_call_operand.vmem [shape: f32[8,3], index: 2, kind: input, shape index: {}]
  %s3 = inlined_call_operand.vmem [shape: f32[2,8,48], index: 3, kind: output, shape index: {}]
  %s4 = sld [smem:[#allocation0]]
  $region45: #{nopad_conv_block.1} parent=0
    _
  %s6 = ssub.s32 1, %s4
  %s7 = scalar_select 0, %s6, %s4
  loop: start=0, step=1, limit=4
  $region2: #{nopad_conv_block.1} parent=0 // loop_pre_header
    _
  $region3: #{nopad_conv_block.1} parent=0 // loop_header
    %s9 = sphi 0, %s13
    %p10 = scmp.ge.s32.totalorder %s9, 4
    %s19 = sphi 0, %s21
    %s22 = sphi 0, %s19
    %s23 = sphi 0, %s22
    %s39 = sphi 0, %s23
    %s43 = sphi 0, %s43
    %s45 = sphi 0, %s43
    %s46 = sphi 0, %s45
    %s60 = sphi 0, %s46
    %s64 = sphi 0, %s64
    %s66 = sphi 0, %s64
    %s67 = sphi 0, %s66
    %s81 = sphi 0, %s67
    %s87 = sphi 0, %s89
    %s90 = sphi 0, %s87
    %s91 = sphi 0, %s90
    %s107 = sphi 0, %s91
  $region4: #{nopad_conv_block.1} parent=0 // loop_header_branch
    %12 = sbr.rel (%p10) target = $region8
  $region5: #{nopad_conv_block.1} parent=0 // loop_body
    %s14 = ssub.s32 %s9, 1
    %s15 = ssub.s32 %s9, 2
    %s16 = sadd.s32 %s9, 1
    %s17 = ssub.s32 %s9, %s16
    %p18 = scmp.eq.s32.totalorder %s17, 0
    %s20 = sadd.s32 %s19, 1
    %s21 = scalar_select %p18, %s19, %s20
    %p24 = pneg %p18
    %p25 = scmp.eq.s32.totalorder %s9, 1
    %p26 = por %p24, %p25
    %p27 = scmp.ne.s32.totalorder %s19, %s22
    %p28 = scmp.eq.s32.totalorder %s9, 0
    %p29 = por %p27, %p28
    %p30 = scmp.ne.s32.totalorder %s19, %s22
    %p31 = scmp.eq.s32.totalorder %s14, 1
    %p32 = por %p30, %p31
    %p33 = scmp.ne.s32.totalorder %s22, %s23
    %p34 = scmp.eq.s32.totalorder %s14, 0
    %p35 = por %p33, %p34
    %p36 = scmp.ne.s32.totalorder %s22, %s23
    %p37 = scmp.eq.s32.totalorder %s15, 1
    %p38 = por %p36, %p37
    %p40 = scmp.ne.s32.totalorder %s23, %s39
    %p41 = scmp.eq.s32.totalorder %s15, 0
    %p42 = por %p40, %p41
    %s44 = sadd.s32 %s43, 1
    %p47 = scmp.eq.s32.totalorder %s9, 1
    %p48 = scmp.ne.s32.totalorder %s43, %s45
    %p49 = scmp.eq.s32.totalorder %s9, 0
    %p50 = por %p48, %p49
    %p51 = scmp.ne.s32.totalorder %s43, %s45
    %p52 = scmp.eq.s32.totalorder %s14, 1
    %p53 = por %p51, %p52
    %p54 = scmp.ne.s32.totalorder %s45, %s46
    %p55 = scmp.eq.s32.totalorder %s14, 0
    %p56 = por %p54, %p55
    %p57 = scmp.ne.s32.totalorder %s45, %s46
    %p58 = scmp.eq.s32.totalorder %s15, 1
    %p59 = por %p57, %p58
    %p61 = scmp.ne.s32.totalorder %s46, %s60
    %p62 = scmp.eq.s32.totalorder %s15, 0
    %p63 = por %p61, %p62
    %s65 = sadd.s32 %s64, 1
    %p68 = scmp.eq.s32.totalorder %s9, 1
    %p69 = scmp.ne.s32.totalorder %s64, %s66
    %p70 = scmp.eq.s32.totalorder %s9, 0
    %p71 = por %p69, %p70
    %p72 = scmp.ne.s32.totalorder %s64, %s66
    %p73 = scmp.eq.s32.totalorder %s14, 1
    %p74 = por %p72, %p73
    %p75 = scmp.ne.s32.totalorder %s66, %s67
    %p76 = scmp.eq.s32.totalorder %s14, 0
    %p77 = por %p75, %p76
    %p78 = scmp.ne.s32.totalorder %s66, %s67
    %p79 = scmp.eq.s32.totalorder %s15, 1
    %p80 = por %p78, %p79
    %p82 = scmp.ne.s32.totalorder %s67, %s81
    %p83 = scmp.eq.s32.totalorder %s15, 0
    %p84 = por %p82, %p83
    %s85 = ssub.s32 %s9, %s16
    %p86 = scmp.eq.s32.totalorder %s85, 0
    %s88 = sadd.s32 %s87, 1
    %s89 = scalar_select %p86, %s87, %s88
    %p92 = pneg %p86
    %p93 = scmp.eq.s32.totalorder %s9, 1
    %p94 = por %p92, %p93
    %p95 = scmp.ne.s32.totalorder %s87, %s90
    %p96 = scmp.eq.s32.totalorder %s9, 0
    %p97 = por %p95, %p96
    %p98 = scmp.ne.s32.totalorder %s87, %s90
    %p99 = scmp.eq.s32.totalorder %s14, 1
    %p100 = por %p98, %p99
    %p101 = scmp.ne.s32.totalorder %s90, %s91
    %p102 = scmp.eq.s32.totalorder %s14, 0
    %p103 = por %p101, %p102
    %p104 = scmp.ne.s32.totalorder %s90, %s91
    %p105 = scmp.eq.s32.totalorder %s15, 1
    %p106 = por %p104, %p105
    %p108 = scmp.ne.s32.totalorder %s91, %s107
    %p109 = scmp.eq.s32.totalorder %s15, 0
    %p110 = por %p108, %p109
    %p111 = scmp.le.s32.totalorder 1, %s9
    %p112 = scmp.lt.s32.totalorder %s9, 3
    %p113 = pnand %p111, %p112
    %p114 = pneg %p113
    // Predicated region
    $region9: #{nopad_conv_block.1} parent=5 // pred_check
      _
    $region10: #{nopad_conv_block.1} parent=5 // pred_check_branch
      %116 = sbr.rel (%p113) target = $region12
    $region11: #{nopad_conv_block.1} parent=5 // pred_region
      %s117 = ssub.s32 %s9, 1
      // Predicated region
      $region13: #{nopad_conv_block.1} parent=11 // pred_check
        %p118 = pneg %p56
      $region14: #{nopad_conv_block.1} parent=11 // pred_check_branch
        %120 = sbr.rel (%p118) target = $region16
      $region15: #{nopad_conv_block.1} parent=11 // pred_region
        _
      $region16: #{nopad_conv_block.1} parent=11 // pred_fallthru
        _
      // Predicated region
      $region17: #{nopad_conv_block.1} parent=11 // pred_check
        %p121 = pneg %p77
      $region18: #{nopad_conv_block.1} parent=11 // pred_check_branch
        %123 = sbr.rel (%p121) target = $region20
      $region19: #{nopad_conv_block.1} parent=11 // pred_region
        _
      $region20: #{nopad_conv_block.1} parent=11 // pred_fallthru
        _
    $region12: #{nopad_conv_block.1} parent=5 // pred_fallthru
      _
    %p124 = scmp.lt.s32.totalorder %s9, 2
    // Predicated region
    $region21: #{nopad_conv_block.1} parent=5 // pred_check
      %p125 = pneg %p124
    $region22: #{nopad_conv_block.1} parent=5 // pred_check_branch
      %127 = sbr.rel (%p125) target = $region24
    $region23: #{nopad_conv_block.1} parent=5 // pred_region
      // Predicated region
      $region25: #{nopad_conv_block.1} parent=23 // pred_check
        %p128 = pneg %p29
      $region26: #{nopad_conv_block.1} parent=23 // pred_check_branch
        %130 = sbr.rel (%p128) target = $region28
      $region27: #{nopad_conv_block.1} parent=23 // pred_region
        %p131 = scmp.lt.s32.totalorder %s9, 1
        %s132 = scalar_select %p131, %s9, 1
        %s133 = smul.addr %s132, 4
        %s134 = scalar_lea.vmem %s0, %s133
      $region28: #{nopad_conv_block.1} parent=23 // pred_fallthru
        _
    $region24: #{nopad_conv_block.1} parent=5 // pred_fallthru
      _
    %p135 = scmp.le.s32.totalorder 1, %s9
    %p136 = scmp.lt.s32.totalorder %s9, 3
    %p137 = pnand %p135, %p136
    %p138 = pneg %p137
    // Predicated region
    $region29: #{nopad_conv_block.1} parent=5 // pred_check
      _
    $region30: #{nopad_conv_block.1} parent=5 // pred_check_branch
      %140 = sbr.rel (%p137) target = $region32
    $region31: #{nopad_conv_block.1} parent=5 // pred_region
      %s141 = ssub.s32 %s9, 1
      %p142 = scmp.lt.s32.totalorder %s14, 1
      %s143 = scalar_select %p142, %s14, 1
      %s144 = smul.addr %s143, 4
      %s145 = scalar_lea.vmem %s0, %s144
      %p146 = pneg %p35
      %p147 = pneg %p32
      %p148 = pneg %p56
      %p149 = pneg %p53
      %p150 = pneg %p77
      %p151 = pneg %p74
      %p152 = pneg %p103
      %p153 = pneg %p100
      %p154 = scmp.lt.s32.totalorder %s14, 1
      %s155 = scalar_select %p154, %s14, 1
      %s156 = smul.addr %s155, 8
      %s157 = scalar_lea.vmem %s3, %s156
      %p158 = scmp.lt.s32.totalorder %s14, 1
      %s159 = scalar_select %p158, %s14, 1
      %s160 = smul.addr %s159, 4
      %s161 = scalar_lea.vmem %s0, %s160
      %p162 = scmp.lt.s32.totalorder %s14, 1
      %s163 = scalar_select %p162, %s14, 1
      %s164 = smul.addr %s163, 8
      %s165 = scalar_lea.vmem %s3, %s164
      %v166 = vld [vmem:[%s2] sm:$0xff]
      %v167 = vld [vmem:[%s161] sm:$0xf]
      %v168 = vld [vmem:[%s1] sm:$0xff]
      %170 = vrot.lane.b32.xlu0 %v168, 124
      %v171 = vpop.permute.xlu0 %170
      %173 = vrot.lane.b32.xlu0 %v167, 64
      %v174 = vpop.permute.xlu0 %173
      %vm175 = vcmask 31744
      %v176 = vsel %vm175, %v171, 0
      %vm178 = vcmask 1043456
      %v179 = vsel %vm178, %v174, 0
      %181 = vmatprep.subr.mxu0 0.0
      %182 = vmatpush1.msra.mxu0 %v179
      %183 = vmatprep.subr.mxu0 0.0
      %184 = vmatpush1.msra.mxu0 0.0
      %185 = vmatprep.subr.mxu0 0.0
      %186 = vmatpush1.msra.mxu0 0.0
      %187 = vmatprep.subr.mxu0 0.0
      %188 = vmatpush1.msra.mxu0 0.0
      %189 = vmatprep.subr.mxu0 0.0
      %190 = vmatpush1.msra.mxu0 0.0
      %191 = vmatprep.subr.mxu0 0.0
      %192 = vmatpush1.msra.mxu0 0.0
      %193 = vmatprep.subr.mxu0 0.0
      %194 = vmatpush1.msra.mxu0 0.0
      %195 = vmatprep.subr.mxu0 0.0
      %196 = vmatpush1.msra.mxu0 0.0
      %197 = vmatprep.subr.mxu0 0.0
      %198 = vmatpush1.msra.mxu0 0.0
      %199 = vmatprep.subr.mxu0 0.0
      %200 = vmatpush1.msra.mxu0 0.0
      %201 = vmatprep.subr.mxu0 0.0
      %202 = vmatpush1.msra.mxu0 0.0
      %203 = vmatprep.subr.mxu0 0.0
      %204 = vmatpush1.msra.mxu0 0.0
      %205 = vmatprep.subr.mxu0 0.0
      %206 = vmatpush1.msra.mxu0 0.0
      %207 = vmatprep.subr.mxu0 0.0
      %208 = vmatpush1.msra.mxu0 0.0
      %209 = vmatprep.subr.mxu0 0.0
      %210 = vmatpush1.msra.mxu0 0.0
      %211 = vmatprep.subr.mxu0 0.0
      %212 = vmatpush1.msra.mxu0 0.0
      %213 = vmatprep.subr.mxu0 0.0
      %214 = vmatpush1.msra.mxu0 0.0
      %215 = vmatprep.subr.mxu0 0.0
      %216 = vmatpush1.msra.mxu0 0.0
      %217 = vmatprep.subr.mxu0 0.0
      %218 = vmatpush1.msra.mxu0 0.0
      %219 = vmatprep.subr.mxu0 0.0
      %220 = vmatpush1.msra.mxu0 0.0
      %221 = vmatprep.subr.mxu0 0.0
      %222 = vmatpush1.msra.mxu0 0.0
      %223 = vmatprep.subr.mxu0 0.0
      %224 = vmatpush1.msra.mxu0 0.0
      %225 = vmatprep.subr.mxu0 0.0
      %226 = vmatpush1.msra.mxu0 0.0
      %227 = vmatprep.subr.mxu0 0.0
      %228 = vmatpush1.msra.mxu0 0.0
      %229 = vmatprep.subr.mxu0 0.0
      %230 = vmatpush1.msra.mxu0 0.0
      %231 = vmatprep.subr.mxu0 0.0
      %232 = vmatpush1.msra.mxu0 0.0
      %233 = vmatprep.subr.mxu0 0.0
      %234 = vmatpush1.msra.mxu0 0.0
      %235 = vmatprep.subr.mxu0 0.0
      %236 = vmatpush1.msra.mxu0 0.0
      %237 = vmatprep.subr.mxu0 0.0
      %238 = vmatpush1.msra.mxu0 0.0
      %239 = vmatprep.subr.mxu0 0.0
      %240 = vmatpush1.msra.mxu0 0.0
      %241 = vmatprep.subr.mxu0 0.0
      %242 = vmatpush1.msra.mxu0 0.0
      %243 = vmatprep.subr.mxu0 0.0
      %244 = vmatpush1.msra.mxu0 0.0
      %245 = vmatprep.mubr.f32.mxu0 0.0
      %246 = vmatmul.mubr.f32.gmra.mrb[0].mxu0 %v176
      %v247 = vpop.f32.mrb[0].mxu0
      %v248 = vadd.f32 0.0, %v247
      %v249 = vpop.f32.mrb[0].mxu0
      %250 = vdwg.mxu0
      %v251 = vsel %vm175, %v168, 0
      %v253 = vsel %vm178, %v167, 0
      %255 = vmatprep.subr.mxu0 0.0
      %256 = vmatpush1.msra.mxu0 %v253
      %257 = vmatprep.subr.mxu0 0.0
      %258 = vmatpush1.msra.mxu0 0.0
      %259 = vmatprep.subr.mxu0 0.0
      %260 = vmatpush1.msra.mxu0 0.0
      %261 = vmatprep.subr.mxu0 0.0
      %262 = vmatpush1.msra.mxu0 0.0
      %263 = vmatprep.subr.mxu0 0.0
      %264 = vmatpush1.msra.mxu0 0.0
      %265 = vmatprep.subr.mxu0 0.0
      %266 = vmatpush1.msra.mxu0 0.0
      %267 = vmatprep.subr.mxu0 0.0
      %268 = vmatpush1.msra.mxu0 0.0
      %269 = vmatprep.subr.mxu0 0.0
      %270 = vmatpush1.msra.mxu0 0.0
      %271 = vmatprep.subr.mxu0 0.0
      %272 = vmatpush1.msra.mxu0 0.0
      %273 = vmatprep.subr.mxu0 0.0
      %274 = vmatpush1.msra.mxu0 0.0
      %275 = vmatprep.subr.mxu0 0.0
      %276 = vmatpush1.msra.mxu0 0.0
      %277 = vmatprep.subr.mxu0 0.0
      %278 = vmatpush1.msra.mxu0 0.0
      %279 = vmatprep.subr.mxu0 0.0
      %280 = vmatpush1.msra.mxu0 0.0
      %281 = vmatprep.subr.mxu0 0.0
      %282 = vmatpush1.msra.mxu0 0.0
      %283 = vmatprep.subr.mxu0 0.0
      %284 = vmatpush1.msra.mxu0 0.0
      %285 = vmatprep.subr.mxu0 0.0
      %286 = vmatpush1.msra.mxu0 0.0
      %287 = vmatprep.subr.mxu0 0.0
      %288 = vmatpush1.msra.mxu0 0.0
      %289 = vmatprep.subr.mxu0 0.0
      %290 = vmatpush1.msra.mxu0 0.0
      %291 = vmatprep.subr.mxu0 0.0
      %292 = vmatpush1.msra.mxu0 0.0
      %293 = vmatprep.subr.mxu0 0.0
      %294 = vmatpush1.msra.mxu0 0.0
      %295 = vmatprep.subr.mxu0 0.0
      %296 = vmatpush1.msra.mxu0 0.0
      %297 = vmatprep.subr.mxu0 0.0
      %298 = vmatpush1.msra.mxu0 0.0
      %299 = vmatprep.subr.mxu0 0.0
      %300 = vmatpush1.msra.mxu0 0.0
      %301 = vmatprep.subr.mxu0 0.0
      %302 = vmatpush1.msra.mxu0 0.0
      %303 = vmatprep.subr.mxu0 0.0
      %304 = vmatpush1.msra.mxu0 0.0
      %305 = vmatprep.subr.mxu0 0.0
      %306 = vmatpush1.msra.mxu0 0.0
      %307 = vmatprep.subr.mxu0 0.0
      %308 = vmatpush1.msra.mxu0 0.0
      %309 = vmatprep.subr.mxu0 0.0
      %310 = vmatpush1.msra.mxu0 0.0
      %311 = vmatprep.subr.mxu0 0.0
      %312 = vmatpush1.msra.mxu0 0.0
      %313 = vmatprep.subr.mxu0 0.0
      %314 = vmatpush1.msra.mxu0 0.0
      %315 = vmatprep.subr.mxu0 0.0
      %316 = vmatpush1.msra.mxu0 0.0
      %317 = vmatprep.subr.mxu0 0.0
      %318 = vmatpush1.msra.mxu0 0.0
      %319 = vmatprep.mubr.f32.mxu0 0.0
      %320 = vmatmul.mubr.f32.gmra.mrb[0].mxu0 %v251
      %v321 = vpop.f32.mrb[0].mxu0
      %v322 = vadd.f32 %v248, %v321
      %v323 = vpop.f32.mrb[0].mxu0
      %324 = vdwg.mxu0
      %325 = vrot.lane.b32.xlu0 %v168, 120
      %v326 = vpop.permute.xlu0 %325
      %327 = vrot.lane.b32.xlu0 %v167, 112
      %v328 = vpop.permute.xlu0 %327
      %v329 = vsel %vm175, %v326, 0
      %v331 = vsel %vm178, %v328, 0
      %333 = vmatprep.subr.mxu0 0.0
      %334 = vmatpush1.msra.mxu0 %v331
      %335 = vmatprep.subr.mxu0 0.0
      %336 = vmatpush1.msra.mxu0 0.0
      %337 = vmatprep.subr.mxu0 0.0
      %338 = vmatpush1.msra.mxu0 0.0
      %339 = vmatprep.subr.mxu0 0.0
      %340 = vmatpush1.msra.mxu0 0.0
      %341 = vmatprep.subr.mxu0 0.0
      %342 = vmatpush1.msra.mxu0 0.0
      %343 = vmatprep.subr.mxu0 0.0
      %344 = vmatpush1.msra.mxu0 0.0
      %345 = vmatprep.subr.mxu0 0.0
      %346 = vmatpush1.msra.mxu0 0.0
      %347 = vmatprep.subr.mxu0 0.0
      %348 = vmatpush1.msra.mxu0 0.0
      %349 = vmatprep.subr.mxu0 0.0
      %350 = vmatpush1.msra.mxu0 0.0
      %351 = vmatprep.subr.mxu0 0.0
      %352 = vmatpush1.msra.mxu0 0.0
      %353 = vmatprep.subr.mxu0 0.0
      %354 = vmatpush1.msra.mxu0 0.0
      %355 = vmatprep.subr.mxu0 0.0
      %356 = vmatpush1.msra.mxu0 0.0
      %357 = vmatprep.subr.mxu0 0.0
      %358 = vmatpush1.msra.mxu0 0.0
      %359 = vmatprep.subr.mxu0 0.0
      %360 = vmatpush1.msra.mxu0 0.0
      %361 = vmatprep.subr.mxu0 0.0
      %362 = vmatpush1.msra.mxu0 0.0
      %363 = vmatprep.subr.mxu0 0.0
      %364 = vmatpush1.msra.mxu0 0.0
      %365 = vmatprep.subr.mxu0 0.0
      %366 = vmatpush1.msra.mxu0 0.0
      %367 = vmatprep.subr.mxu0 0.0
      %368 = vmatpush1.msra.mxu0 0.0
      %369 = vmatprep.subr.mxu0 0.0
      %370 = vmatpush1.msra.mxu0 0.0
      %371 = vmatprep.subr.mxu0 0.0
      %372 = vmatpush1.msra.mxu0 0.0
      %373 = vmatprep.subr.mxu0 0.0
      %374 = vmatpush1.msra.mxu0 0.0
      %375 = vmatprep.subr.mxu0 0.0
      %376 = vmatpush1.msra.mxu0 0.0
      %377 = vmatprep.subr.mxu0 0.0
      %378 = vmatpush1.msra.mxu0 0.0
      %379 = vmatprep.subr.mxu0 0.0
      %380 = vmatpush1.msra.mxu0 0.0
      %381 = vmatprep.subr.mxu0 0.0
      %382 = vmatpush1.msra.mxu0 0.0
      %383 = vmatprep.subr.mxu0 0.0
      %384 = vmatpush1.msra.mxu0 0.0
      %385 = vmatprep.subr.mxu0 0.0
      %386 = vmatpush1.msra.mxu0 0.0
      %387 = vmatprep.subr.mxu0 0.0
      %388 = vmatpush1.msra.mxu0 0.0
      %389 = vmatprep.subr.mxu0 0.0
      %390 = vmatpush1.msra.mxu0 0.0
      %391 = vmatprep.subr.mxu0 0.0
      %392 = vmatpush1.msra.mxu0 0.0
      %393 = vmatprep.subr.mxu0 0.0
      %394 = vmatpush1.msra.mxu0 0.0
      %395 = vmatprep.subr.mxu0 0.0
      %396 = vmatpush1.msra.mxu0 0.0
      %397 = vmatprep.mubr.f32.mxu0 0.0
      %398 = vmatmul.mubr.f32.gmra.mrb[0].mxu0 %v329
      %v399 = vpop.f32.mrb[0].mxu0
      %v400 = vadd.f32 0.0, %v399
      %v401 = vpop.f32.mrb[0].mxu0
      %402 = vdwg.mxu0
      %v403 = vadd.f32 %v322, %v400
      %405 = vset.pattern.permute.xlu0 0
      %406 = vperm.xlu0 %405, %v166
      %v407 = vpop.permute.xlu0 %406
      %v409 = vadd.f32 %v403, %v407
      %v410 = vmax.f32 %v409, 0.0
      %411 = vset.pattern.permute.xlu0 1
      %412 = vperm.xlu0 %411, %v166
      %v413 = vpop.permute.xlu0 %412
      %v415 = vmul.f32 %v410, %v413
      %416 = vset.pattern.permute.xlu0 2
      %417 = vperm.xlu0 %416, %v166
      %v418 = vpop.permute.xlu0 %417
      %v420 = vadd.f32 %v415, %v418
      %421 = vmatprep.subr.mxu0 0.0
      %422 = vmatpush1.msra.mxu0 %v331
      %423 = vmatprep.subr.mxu0 0.0
      %424 = vmatpush1.msra.mxu0 0.0
      %425 = vmatprep.subr.mxu0 0.0
      %426 = vmatpush1.msra.mxu0 0.0
      %427 = vmatprep.subr.mxu0 0.0
      %428 = vmatpush1.msra.mxu0 0.0
      %429 = vmatprep.subr.mxu0 0.0
      %430 = vmatpush1.msra.mxu0 0.0
      %431 = vmatprep.subr.mxu0 0.0
      %432 = vmatpush1.msra.mxu0 0.0
      %433 = vmatprep.subr.mxu0 0.0
      %434 = vmatpush1.msra.mxu0 0.0
      %435 = vmatprep.subr.mxu0 0.0
      %436 = vmatpush1.msra.mxu0 0.0
      %437 = vmatprep.subr.mxu0 0.0
      %438 = vmatpush1.msra.mxu0 0.0
      %439 = vmatprep.subr.mxu0 0.0
      %440 = vmatpush1.msra.mxu0 0.0
      %441 = vmatprep.subr.mxu0 0.0
      %442 = vmatpush1.msra.mxu0 0.0
      %443 = vmatprep.subr.mxu0 0.0
      %444 = vmatpush1.msra.mxu0 0.0
      %445 = vmatprep.subr.mxu0 0.0
      %446 = vmatpush1.msra.mxu0 0.0
      %447 = vmatprep.subr.mxu0 0.0
      %448 = vmatpush1.msra.mxu0 0.0
      %449 = vmatprep.subr.mxu0 0.0
      %450 = vmatpush1.msra.mxu0 0.0
      %451 = vmatprep.subr.mxu0 0.0
      %452 = vmatpush1.msra.mxu0 0.0
      %453 = vmatprep.subr.mxu0 0.0
      %454 = vmatpush1.msra.mxu0 0.0
      %455 = vmatprep.subr.mxu0 0.0
      %456 = vmatpush1.msra.mxu0 0.0
      %457 = vmatprep.subr.mxu0 0.0
      %458 = vmatpush1.msra.mxu0 0.0
      %459 = vmatprep.subr.mxu0 0.0
      %460 = vmatpush1.msra.mxu0 0.0
      %461 = vmatprep.subr.mxu0 0.0
      %462 = vmatpush1.msra.mxu0 0.0
      %463 = vmatprep.subr.mxu0 0.0
      %464 = vmatpush1.msra.mxu0 0.0
      %465 = vmatprep.subr.mxu0 0.0
      %466 = vmatpush1.msra.mxu0 0.0
      %467 = vmatprep.subr.mxu0 0.0
      %468 = vmatpush1.msra.mxu0 0.0
      %469 = vmatprep.subr.mxu0 0.0
      %470 = vmatpush1.msra.mxu0 0.0
      %471 = vmatprep.subr.mxu0 0.0
      %472 = vmatpush1.msra.mxu0 0.0
      %473 = vmatprep.subr.mxu0 0.0
      %474 = vmatpush1.msra.mxu0 0.0
      %475 = vmatprep.subr.mxu0 0.0
      %476 = vmatpush1.msra.mxu0 0.0
      %477 = vmatprep.subr.mxu0 0.0
      %478 = vmatpush1.msra.mxu0 0.0
      %479 = vmatprep.subr.mxu0 0.0
      %480 = vmatpush1.msra.mxu0 0.0
      %481 = vmatprep.subr.mxu0 0.0
      %482 = vmatpush1.msra.mxu0 0.0
      %483 = vmatprep.subr.mxu0 0.0
      %484 = vmatpush1.msra.mxu0 0.0
      %485 = vmatprep.mubr.f32.mxu0 0.0
      %486 = vmatmul.mubr.f32.gmra.mrb[0].mxu0 %v176
      %v487 = vpop.f32.mrb[0].mxu0
      %v488 = vadd.f32 0.0, %v487
      %v489 = vpop.f32.mrb[0].mxu0
      %490 = vdwg.mxu0
      %491 = vmatprep.subr.mxu0 0.0
      %492 = vmatpush1.msra.mxu0 %v179
      %493 = vmatprep.subr.mxu0 0.0
      %494 = vmatpush1.msra.mxu0 0.0
      %495 = vmatprep.subr.mxu0 0.0
      %496 = vmatpush1.msra.mxu0 0.0
      %497 = vmatprep.subr.mxu0 0.0
      %498 = vmatpush1.msra.mxu0 0.0
      %499 = vmatprep.subr.mxu0 0.0
      %500 = vmatpush1.msra.mxu0 0.0
      %501 = vmatprep.subr.mxu0 0.0
      %502 = vmatpush1.msra.mxu0 0.0
      %503 = vmatprep.subr.mxu0 0.0
      %504 = vmatpush1.msra.mxu0 0.0
      %505 = vmatprep.subr.mxu0 0.0
      %506 = vmatpush1.msra.mxu0 0.0
      %507 = vmatprep.subr.mxu0 0.0
      %508 = vmatpush1.msra.mxu0 0.0
      %509 = vmatprep.subr.mxu0 0.0
      %510 = vmatpush1.msra.mxu0 0.0
      %511 = vmatprep.subr.mxu0 0.0
      %512 = vmatpush1.msra.mxu0 0.0
      %513 = vmatprep.subr.mxu0 0.0
      %514 = vmatpush1.msra.mxu0 0.0
      %515 = vmatprep.subr.mxu0 0.0
      %516 = vmatpush1.msra.mxu0 0.0
      %517 = vmatprep.subr.mxu0 0.0
      %518 = vmatpush1.msra.mxu0 0.0
      %519 = vmatprep.subr.mxu0 0.0
      %520 = vmatpush1.msra.mxu0 0.0
      %521 = vmatprep.subr.mxu0 0.0
      %522 = vmatpush1.msra.mxu0 0.0
      %523 = vmatprep.subr.mxu0 0.0
      %524 = vmatpush1.msra.mxu0 0.0
      %525 = vmatprep.subr.mxu0 0.0
      %526 = vmatpush1.msra.mxu0 0.0
      %527 = vmatprep.subr.mxu0 0.0
      %528 = vmatpush1.msra.mxu0 0.0
      %529 = vmatprep.subr.mxu0 0.0
      %530 = vmatpush1.msra.mxu0 0.0
      %531 = vmatprep.subr.mxu0 0.0
      %532 = vmatpush1.msra.mxu0 0.0
      %533 = vmatprep.subr.mxu0 0.0
      %534 = vmatpush1.msra.mxu0 0.0
      %535 = vmatprep.subr.mxu0 0.0
      %536 = vmatpush1.msra.mxu0 0.0
      %537 = vmatprep.subr.mxu0 0.0
      %538 = vmatpush1.msra.mxu0 0.0
      %539 = vmatprep.subr.mxu0 0.0
      %540 = vmatpush1.msra.mxu0 0.0
      %541 = vmatprep.subr.mxu0 0.0
      %542 = vmatpush1.msra.mxu0 0.0
      %543 = vmatprep.subr.mxu0 0.0
      %544 = vmatpush1.msra.mxu0 0.0
      %545 = vmatprep.subr.mxu0 0.0
      %546 = vmatpush1.msra.mxu0 0.0
      %547 = vmatprep.subr.mxu0 0.0
      %548 = vmatpush1.msra.mxu0 0.0
      %549 = vmatprep.subr.mxu0 0.0
      %550 = vmatpush1.msra.mxu0 0.0
      %551 = vmatprep.subr.mxu0 0.0
      %552 = vmatpush1.msra.mxu0 0.0
      %553 = vmatprep.subr.mxu0 0.0
      %554 = vmatpush1.msra.mxu0 0.0
      %555 = vmatprep.mubr.f32.mxu0 0.0
      %556 = vmatmul.mubr.f32.gmra.mrb[0].mxu0 %v251
      %v557 = vpop.f32.mrb[0].mxu0
      %v558 = vadd.f32 %v488, %v557
      %v559 = vpop.f32.mrb[0].mxu0
      %560 = vdwg.mxu0
      %561 = vrot.lane.b32.xlu0 %v167, 48
      %v562 = vpop.permute.xlu0 %561
      %v563 = vsel %vm178, %v562, 0
      %565 = vmatprep.subr.mxu0 0.0
      %566 = vmatpush1.msra.mxu0 %v563
      %567 = vmatprep.subr.mxu0 0.0
      %568 = vmatpush1.msra.mxu0 0.0
      %569 = vmatprep.subr.mxu0 0.0
      %570 = vmatpush1.msra.mxu0 0.0
      %571 = vmatprep.subr.mxu0 0.0
      %572 = vmatpush1.msra.mxu0 0.0
      %573 = vmatprep.subr.mxu0 0.0
      %574 = vmatpush1.msra.mxu0 0.0
      %575 = vmatprep.subr.mxu0 0.0
      %576 = vmatpush1.msra.mxu0 0.0
      %577 = vmatprep.subr.mxu0 0.0
      %578 = vmatpush1.msra.mxu0 0.0
      %579 = vmatprep.subr.mxu0 0.0
      %580 = vmatpush1.msra.mxu0 0.0
      %581 = vmatprep.subr.mxu0 0.0
      %582 = vmatpush1.msra.mxu0 0.0
      %583 = vmatprep.subr.mxu0 0.0
      %584 = vmatpush1.msra.mxu0 0.0
      %585 = vmatprep.subr.mxu0 0.0
      %586 = vmatpush1.msra.mxu0 0.0
      %587 = vmatprep.subr.mxu0 0.0
      %588 = vmatpush1.msra.mxu0 0.0
      %589 = vmatprep.subr.mxu0 0.0
      %590 = vmatpush1.msra.mxu0 0.0
      %591 = vmatprep.subr.mxu0 0.0
      %592 = vmatpush1.msra.mxu0 0.0
      %593 = vmatprep.subr.mxu0 0.0
      %594 = vmatpush1.msra.mxu0 0.0
      %595 = vmatprep.subr.mxu0 0.0
      %596 = vmatpush1.msra.mxu0 0.0
      %597 = vmatprep.subr.mxu0 0.0
      %598 = vmatpush1.msra.mxu0 0.0
      %599 = vmatprep.subr.mxu0 0.0
      %600 = vmatpush1.msra.mxu0 0.0
      %601 = vmatprep.subr.mxu0 0.0
      %602 = vmatpush1.msra.mxu0 0.0
      %603 = vmatprep.subr.mxu0 0.0
      %604 = vmatpush1.msra.mxu0 0.0
      %605 = vmatprep.subr.mxu0 0.0
      %606 = vmatpush1.msra.mxu0 0.0
      %607 = vmatprep.subr.mxu0 0.0
      %608 = vmatpush1.msra.mxu0 0.0
      %609 = vmatprep.subr.mxu0 0.0
      %610 = vmatpush1.msra.mxu0 0.0
      %611 = vmatprep.subr.mxu0 0.0
      %612 = vmatpush1.msra.mxu0 0.0
      %613 = vmatprep.subr.mxu0 0.0
      %614 = vmatpush1.msra.mxu0 0.0
      %615 = vmatprep.subr.mxu0 0.0
      %616 = vmatpush1.msra.mxu0 0.0
      %617 = vmatprep.subr.mxu0 0.0
      %618 = vmatpush1.msra.mxu0 0.0
      %619 = vmatprep.subr.mxu0 0.0
      %620 = vmatpush1.msra.mxu0 0.0
      %621 = vmatprep.subr.mxu0 0.0
      %622 = vmatpush1.msra.mxu0 0.0
      %623 = vmatprep.subr.mxu0 0.0
      %624 = vmatpush1.msra.mxu0 0.0
      %625 = vmatprep.subr.mxu0 0.0
      %626 = vmatpush1.msra.mxu0 0.0
      %627 = vmatprep.subr.mxu0 0.0
      %628 = vmatpush1.msra.mxu0 0.0
      %629 = vmatprep.mubr.f32.mxu0 0.0
      %630 = vmatmul.mubr.f32.gmra.mrb[0].mxu0 %v329
      %v631 = vpop.f32.mrb[0].mxu0
      %v632 = vadd.f32 0.0, %v631
      %v633 = vpop.f32.mrb[0].mxu0
      %634 = vdwg.mxu0
      %v635 = vadd.f32 %v558, %v632
      %v636 = vadd.f32 %v635, %v407
      %v637 = vmax.f32 %v636, 0.0
      %v638 = vmul.f32 %v637, %v413
      %v639 = vadd.f32 %v638, %v418
      %v640 = vmax.f32 %v420, %v639
      %vm641 = vcmask 392192
      %642 = vst.msk [vmem:[%s165] sm:$0xff] %vm641, %v640
      %p643 = scmp.lt.s32.totalorder %s14, 1
      %s644 = scalar_select %p643, %s14, 1
      %s645 = smul.addr %s644, 8
      %s646 = scalar_lea.vmem %s3, %s645
      // Predicated region
      $region33: #{nopad_conv_block.1} parent=31 // pred_check
        %p647 = pneg %p100
      $region34: #{nopad_conv_block.1} parent=31 // pred_check_branch
        %649 = sbr.rel (%p647) target = $region36
      $region35: #{nopad_conv_block.1} parent=31 // pred_region
        _
      $region36: #{nopad_conv_block.1} parent=31 // pred_fallthru
        _
    $region32: #{nopad_conv_block.1} parent=5 // pred_fallthru
      _
    %p650 = scmp.le.s32.totalorder 2, %s9
    // Predicated region
    $region37: #{nopad_conv_block.1} parent=5 // pred_check
      %p651 = pneg %p650
    $region38: #{nopad_conv_block.1} parent=5 // pred_check_branch
      %653 = sbr.rel (%p651) target = $region40
    $region39: #{nopad_conv_block.1} parent=5 // pred_region
      %s654 = ssub.s32 %s9, 2
      // Predicated region
      $region41: #{nopad_conv_block.1} parent=39 // pred_check
        %p655 = pneg %p106
      $region42: #{nopad_conv_block.1} parent=39 // pred_check_branch
        %657 = sbr.rel (%p655) target = $region44
      $region43: #{nopad_conv_block.1} parent=39 // pred_region
        %p658 = scmp.lt.s32.totalorder %s15, 1
        %s659 = scalar_select %p658, %s15, 1
        %s660 = smul.addr %s659, 8
        %s661 = scalar_lea.vmem %s3, %s660
      $region44: #{nopad_conv_block.1} parent=39 // pred_fallthru
        _
    $region40: #{nopad_conv_block.1} parent=5 // pred_fallthru
      _
  $region6: #{nopad_conv_block.1} parent=0 // loop_footer
    %s13 = sadd.s32 1, %s9
  $region7: #{nopad_conv_block.1} parent=0 // loop_footer_branch
    %8 = sbr.rel target = $region3
  $region8: #{nopad_conv_block.1} parent=0 // loop_exit
    _

</llo_original>
